<compile_context>
chip_gen: v7x
topology: tpu7x:2x2x1
jax: 0.10.0
libtpu: 0.0.40
codegen_flags: <defaults>
</compile_context>

<pallas_src>
import jax
import jax.numpy as jnp
from jax.experimental import pallas as pl
from jax.experimental.pallas import tpu as pltpu

BN_EPS = 1e-5


def _round_up(n, m):
    return ((n + m - 1) // m) * m


def _elu(x):
    # ELU with alpha=1.0 (torch.nn.ELU default).  exp(x)-1 on the clamped
    # negative branch; precision loss vs expm1 is << the bf16 matmul noise.
    return jnp.where(x > 0, x, jnp.exp(jnp.minimum(x, 0.0)) - 1.0)


def stockwish_mlp_kernel(
    x_ref,
    w1_ref, t1_ref,
    w2_ref, t2_ref,
    w3_ref, t3_ref,
    w4_ref, b4_ref,
    o_ref,
):
    # bf16 operands on the MXU, f32 accumulation, f32 elementwise math.
    x = x_ref[...].astype(jnp.bfloat16)

    # hidden_1: Linear (BN folded) + ELU
    h = jnp.dot(x, w1_ref[...], preferred_element_type=jnp.float32) + t1_ref[...]
    h = _elu(h)

    # hidden_2
    h = jnp.dot(h.astype(jnp.bfloat16), w2_ref[...],
                preferred_element_type=jnp.float32) + t2_ref[...]
    h = _elu(h)

    # hidden_3
    h = jnp.dot(h.astype(jnp.bfloat16), w3_ref[...],
                preferred_element_type=jnp.float32) + t3_ref[...]
    h = _elu(h)

    # linear_out (num_classes == 1): VPU multiply + XLU lane reduction instead
    # of a 1-column MXU pass, then Sigmoid with the EUP approx reciprocal.
    z = jnp.sum(h * w4_ref[...], axis=-1, keepdims=True) + b4_ref[...]
    o_ref[...] = pl.reciprocal(1.0 + jnp.exp(-z), approx=True).astype(o_ref.dtype)


def stockwish_mlp_forward(x, params, *, block_b=None):
    """Fused MLP forward.  x: (B, F) float32.  Returns (B, 1) float32."""
    B, F = x.shape
    H = params["w1"].shape[1]
    C = params["w4"].shape[1]
    assert C == 1, "kernel specializes the final layer for num_classes == 1"

    Hp = _round_up(H, 128)           # lane-align the hidden width
    pad_h = Hp - H

    def fold(w, b, g, be, m, v, pad_in):
        # Fold eval-mode BatchNorm1d into the preceding Linear (done in f32).
        s = g / jnp.sqrt(v + BN_EPS)
        wf = (w * s[None, :]).astype(jnp.bfloat16)
        tf = b * s + be - m * s
        wf = jnp.pad(wf, ((0, pad_in), (0, pad_h)))
        tf = jnp.pad(tf, (0, pad_h)).reshape(1, Hp).astype(jnp.float32)
        return wf, tf

    w1p, t1 = fold(params["w1"], params["b1"], params["g1"], params["be1"],
                   params["m1"], params["v1"], 0)
    w2p, t2 = fold(params["w2"], params["b2"], params["g2"], params["be2"],
                   params["m2"], params["v2"], pad_h)
    w3p, t3 = fold(params["w3"], params["b3"], params["g3"], params["be3"],
                   params["m3"], params["v3"], pad_h)

    # Final layer stored as a (1, Hp) row (kept f32 for the VPU reduction).
    w4row = jnp.pad(params["w4"][:, 0], (0, pad_h)).reshape(1, Hp).astype(jnp.float32)
    b4 = params["b4"].reshape(1, 1).astype(jnp.float32)

    # Batch tiling: many grid steps -> DMA/compute pipelining, bounded VMEM,
    # and megacore sharding on v7x.
    if block_b is None:
        block_b = min(512, _round_up(B, 8))
    block_b = max(8, _round_up(block_b, 8))
    nb = pl.cdiv(B, block_b)
    Bp = nb * block_b
    if Bp != B:
        x = jnp.pad(x, ((0, Bp - B), (0, 0)))

    const = lambda shape: pl.BlockSpec(shape, lambda i: (0, 0))
    in_specs = [
        pl.BlockSpec((block_b, F), lambda i: (i, 0)),   # x batch tile
        const((F, Hp)), const((1, Hp)),                 # layer 1 (BN folded)
        const((Hp, Hp)), const((1, Hp)),                # layer 2 (BN folded)
        const((Hp, Hp)), const((1, Hp)),                # layer 3 (BN folded)
        const((1, Hp)), const((1, 1)),                  # output layer
    ]
    out_spec = pl.BlockSpec((block_b, 1), lambda i: (i, 0))

    out = pl.pallas_call(
        stockwish_mlp_kernel,
        out_shape=jax.ShapeDtypeStruct((Bp, 1), jnp.float32),
        grid_spec=pltpu.PrefetchScalarGridSpec(
            num_scalar_prefetch=0,
            grid=(nb,),
            in_specs=in_specs,
            out_specs=out_spec,
        ),
        compiler_params=pltpu.CompilerParams(
            dimension_semantics=("parallel",)),
    )(
        x,
        w1p, t1,
        w2p, t2,
        w3p, t3,
        w4row, b4,
    )
    return out[:B]


def init_params(key, num_features, num_units_hidden, num_classes=1):
    """Deterministic synthetic parameters (shapes match the PyTorch module)."""
    F, H, C = num_features, num_units_hidden, num_classes
    ks = jax.random.split(key, 20)

    def lin(kw, kb, fan_in, fan_out):
        # weights stored transposed: (in, out)
        bound = 1.0 / jnp.sqrt(fan_in)
        w = jax.random.uniform(kw, (fan_in, fan_out), jnp.float32, -bound, bound)
        b = jax.random.uniform(kb, (fan_out,), jnp.float32, -bound, bound)
        return w, b

    w1, b1 = lin(ks[0], ks[1], F, H)
    w2, b2 = lin(ks[2], ks[3], H, H)
    w3, b3 = lin(ks[4], ks[5], H, H)
    w4, b4 = lin(ks[6], ks[7], H, C)

    def bn(kg, kb, km, kv, n):
        gamma = 1.0 + 0.1 * jax.random.normal(kg, (n,), jnp.float32)
        beta = 0.1 * jax.random.normal(kb, (n,), jnp.float32)
        mean = 0.1 * jax.random.normal(km, (n,), jnp.float32)
        var = jnp.abs(1.0 + 0.1 * jax.random.normal(kv, (n,), jnp.float32))
        return gamma, beta, mean, var

    g1, be1, m1, v1 = bn(ks[8], ks[9], ks[10], ks[11], H)
    g2, be2, m2, v2 = bn(ks[12], ks[13], ks[14], ks[15], H)
    g3, be3, m3, v3 = bn(ks[16], ks[17], ks[18], ks[19], H)

    return dict(
        w1=w1, b1=b1, w2=w2, b2=b2, w3=w3, b3=b3, w4=w4, b4=b4,
        g1=g1, be1=be1, m1=m1, v1=v1,
        g2=g2, be2=be2, m2=m2, v2=v2,
        g3=g3, be3=be3, m3=m3, v3=v3,
    )


def reference_forward(x, params):
    """Pure-JAX f32 reference (eval-mode BatchNorm1d, ELU alpha=1, Sigmoid)."""
    def layer(h, w, b, g, be, m, v):
        h = h @ w + b
        h = g * (h - m) / jnp.sqrt(v + BN_EPS) + be
        return jnp.where(h > 0, h, jnp.exp(jnp.minimum(h, 0.0)) - 1.0)

    h = layer(x, params["w1"], params["b1"], params["g1"], params["be1"],
              params["m1"], params["v1"])
    h = layer(h, params["w2"], params["b2"], params["g2"], params["be2"],
              params["m2"], params["v2"])
    h = layer(h, params["w3"], params["b3"], params["g3"], params["be3"],
              params["m3"], params["v3"])
    z = h @ params["w4"] + params["b4"]
    return jax.nn.sigmoid(z)


if __name__ == "__main__":
    # Small shapes consistent with the module: batch=8, features=32, hidden=32.
    B, F, H, C = 8, 32, 32, 1
    key = jax.random.PRNGKey(0)
    kx, kp = jax.random.split(key)
    x = jax.random.normal(kx, (B, F), jnp.float32)
    params = init_params(kp, F, H, C)

    out = jax.block_until_ready(stockwish_mlp_forward(x, params))
    ref = reference_forward(x, params)
    assert out.shape == (B, C)
    # bf16 matmul operands + approx reciprocal -> relaxed tolerance vs f32 ref.
    assert jnp.allclose(out, ref, atol=2e-2, rtol=2e-2), "mismatch vs JAX reference"

    # Also exercise the multi-step grid + batch-padding path (grid of 4 tiles).
    B2 = 50
    x2 = jax.random.normal(jax.random.PRNGKey(1), (B2, F), jnp.float32)
    out2 = jax.block_until_ready(stockwish_mlp_forward(x2, params, block_b=16))
    ref2 = reference_forward(x2, params)
    assert out2.shape == (B2, C)
    assert jnp.allclose(out2, ref2, atol=2e-2, rtol=2e-2), "mismatch (tiled path)"

    print("KERNEL_OK")
</pallas_src>

<mosaic_0001>
module attributes {stable_mosaic.version = 11 : i64} {
  func.func @stockwish_mlp_kernel(%arg0: i32, %arg1: memref<8x32xf32, #tpu.memory_space<vmem>>, %arg2: memref<32x128xbf16, #tpu.memory_space<vmem>>, %arg3: memref<1x128xf32, #tpu.memory_space<vmem>>, %arg4: memref<128x128xbf16, #tpu.memory_space<vmem>>, %arg5: memref<1x128xf32, #tpu.memory_space<vmem>>, %arg6: memref<128x128xbf16, #tpu.memory_space<vmem>>, %arg7: memref<1x128xf32, #tpu.memory_space<vmem>>, %arg8: memref<1x128xf32, #tpu.memory_space<vmem>>, %arg9: memref<1x1xf32, #tpu.memory_space<vmem>>, %arg10: memref<8x1xf32, #tpu.memory_space<vmem>>) attributes {dimension_semantics = [#tpu.dimension_semantics<parallel>], iteration_bounds = array<i64: 1>, scalar_prefetch = 0 : i64, scratch_operands = 0 : i64, tpu.core_type = #tpu.core_type<tc>, window_params = [{transform_indices = @transform_0, window_bounds = array<i64: 8, 32>}, {pipeline_mode = #tpu.pipeline_mode<synchronous>, transform_indices = @transform_1, window_bounds = array<i64: 32, 128>}, {pipeline_mode = #tpu.pipeline_mode<synchronous>, transform_indices = @transform_2, window_bounds = array<i64: 1, 128>}, {pipeline_mode = #tpu.pipeline_mode<synchronous>, transform_indices = @transform_3, window_bounds = array<i64: 128, 128>}, {pipeline_mode = #tpu.pipeline_mode<synchronous>, transform_indices = @transform_4, window_bounds = array<i64: 1, 128>}, {pipeline_mode = #tpu.pipeline_mode<synchronous>, transform_indices = @transform_5, window_bounds = array<i64: 128, 128>}, {pipeline_mode = #tpu.pipeline_mode<synchronous>, transform_indices = @transform_6, window_bounds = array<i64: 1, 128>}, {pipeline_mode = #tpu.pipeline_mode<synchronous>, transform_indices = @transform_7, window_bounds = array<i64: 1, 128>}, {pipeline_mode = #tpu.pipeline_mode<synchronous>, transform_indices = @transform_8, window_bounds = array<i64: 1, 1>}, {transform_indices = @transform_9, window_bounds = array<i64: 8, 1>}]} {
    %c0 = arith.constant 0 : index
    %c0_0 = arith.constant 0 : index
    %0 = vector.load %arg1[%c0, %c0_0] : memref<8x32xf32, #tpu.memory_space<vmem>>, vector<8x32xf32>
    %1 = arith.truncf %0 : vector<8x32xf32> to vector<8x32xbf16>
    %c0_1 = arith.constant 0 : index
    %c0_2 = arith.constant 0 : index
    %2 = vector.load %arg2[%c0_1, %c0_2] : memref<32x128xbf16, #tpu.memory_space<vmem>>, vector<32x128xbf16>
    %cst = arith.constant dense<0.000000e+00> : vector<8x128xf32>
    %3 = tpu.matmul %1, %2, %cst {dimension_numbers = #tpu.dot_dimension_numbers<[1], [0], [0], [1], [0, 0, 1, 1], [], []>} : vector<8x32xbf16>, vector<32x128xbf16>, vector<8x128xf32> -> vector<8x128xf32>
    %c0_3 = arith.constant 0 : index
    %c0_4 = arith.constant 0 : index
    %4 = vector.load %arg3[%c0_3, %c0_4] : memref<1x128xf32, #tpu.memory_space<vmem>>, vector<1x128xf32>
    %5 = vector.broadcast %4 : vector<1x128xf32> to vector<8x128xf32>
    %6 = arith.addf %3, %5 : vector<8x128xf32>
    %cst_5 = arith.constant 0.000000e+00 : f32
    %7 = vector.broadcast %cst_5 : f32 to vector<8x128xf32>
    %8 = arith.cmpf ogt, %6, %7 : vector<8x128xf32>
    %cst_6 = arith.constant 0.000000e+00 : f32
    %9 = vector.broadcast %cst_6 : f32 to vector<8x128xf32>
    %10 = arith.minimumf %6, %9 : vector<8x128xf32>
    %11 = math.exp %10 : vector<8x128xf32>
    %cst_7 = arith.constant 1.000000e+00 : f32
    %12 = vector.broadcast %cst_7 : f32 to vector<8x128xf32>
    %13 = arith.subf %11, %12 : vector<8x128xf32>
    %14 = arith.select %8, %6, %13 : vector<8x128xi1>, vector<8x128xf32>
    %15 = arith.truncf %14 : vector<8x128xf32> to vector<8x128xbf16>
    %c0_8 = arith.constant 0 : index
    %c0_9 = arith.constant 0 : index
    %16 = vector.load %arg4[%c0_8, %c0_9] : memref<128x128xbf16, #tpu.memory_space<vmem>>, vector<128x128xbf16>
    %cst_10 = arith.constant dense<0.000000e+00> : vector<8x128xf32>
    %17 = tpu.matmul %15, %16, %cst_10 {dimension_numbers = #tpu.dot_dimension_numbers<[1], [0], [0], [1], [0, 0, 1, 1], [], []>} : vector<8x128xbf16>, vector<128x128xbf16>, vector<8x128xf32> -> vector<8x128xf32>
    %c0_11 = arith.constant 0 : index
    %c0_12 = arith.constant 0 : index
    %18 = vector.load %arg5[%c0_11, %c0_12] : memref<1x128xf32, #tpu.memory_space<vmem>>, vector<1x128xf32>
    %19 = vector.broadcast %18 : vector<1x128xf32> to vector<8x128xf32>
    %20 = arith.addf %17, %19 : vector<8x128xf32>
    %cst_13 = arith.constant 0.000000e+00 : f32
    %21 = vector.broadcast %cst_13 : f32 to vector<8x128xf32>
    %22 = arith.cmpf ogt, %20, %21 : vector<8x128xf32>
    %cst_14 = arith.constant 0.000000e+00 : f32
    %23 = vector.broadcast %cst_14 : f32 to vector<8x128xf32>
    %24 = arith.minimumf %20, %23 : vector<8x128xf32>
    %25 = math.exp %24 : vector<8x128xf32>
    %cst_15 = arith.constant 1.000000e+00 : f32
    %26 = vector.broadcast %cst_15 : f32 to vector<8x128xf32>
    %27 = arith.subf %25, %26 : vector<8x128xf32>
    %28 = arith.select %22, %20, %27 : vector<8x128xi1>, vector<8x128xf32>
    %29 = arith.truncf %28 : vector<8x128xf32> to vector<8x128xbf16>
    %c0_16 = arith.constant 0 : index
    %c0_17 = arith.constant 0 : index
    %30 = vector.load %arg6[%c0_16, %c0_17] : memref<128x128xbf16, #tpu.memory_space<vmem>>, vector<128x128xbf16>
    %cst_18 = arith.constant dense<0.000000e+00> : vector<8x128xf32>
    %31 = tpu.matmul %29, %30, %cst_18 {dimension_numbers = #tpu.dot_dimension_numbers<[1], [0], [0], [1], [0, 0, 1, 1], [], []>} : vector<8x128xbf16>, vector<128x128xbf16>, vector<8x128xf32> -> vector<8x128xf32>
    %c0_19 = arith.constant 0 : index
    %c0_20 = arith.constant 0 : index
    %32 = vector.load %arg7[%c0_19, %c0_20] : memref<1x128xf32, #tpu.memory_space<vmem>>, vector<1x128xf32>
    %33 = vector.broadcast %32 : vector<1x128xf32> to vector<8x128xf32>
    %34 = arith.addf %31, %33 : vector<8x128xf32>
    %cst_21 = arith.constant 0.000000e+00 : f32
    %35 = vector.broadcast %cst_21 : f32 to vector<8x128xf32>
    %36 = arith.cmpf ogt, %34, %35 : vector<8x128xf32>
    %cst_22 = arith.constant 0.000000e+00 : f32
    %37 = vector.broadcast %cst_22 : f32 to vector<8x128xf32>
    %38 = arith.minimumf %34, %37 : vector<8x128xf32>
    %39 = math.exp %38 : vector<8x128xf32>
    %cst_23 = arith.constant 1.000000e+00 : f32
    %40 = vector.broadcast %cst_23 : f32 to vector<8x128xf32>
    %41 = arith.subf %39, %40 : vector<8x128xf32>
    %42 = arith.select %36, %34, %41 : vector<8x128xi1>, vector<8x128xf32>
    %c0_24 = arith.constant 0 : index
    %c0_25 = arith.constant 0 : index
    %43 = vector.load %arg8[%c0_24, %c0_25] : memref<1x128xf32, #tpu.memory_space<vmem>>, vector<1x128xf32>
    %44 = vector.broadcast %43 : vector<1x128xf32> to vector<8x128xf32>
    %45 = arith.mulf %42, %44 : vector<8x128xf32>
    %cst_26 = arith.constant dense<0.000000e+00> : vector<8xf32>
    %46 = vector.multi_reduction <add>, %45, %cst_26 [1] : vector<8x128xf32> to vector<8xf32>
    %47 = vector.shape_cast %46 : vector<8xf32> to vector<8x1xf32>
    %c0_27 = arith.constant 0 : index
    %c0_28 = arith.constant 0 : index
    %48 = vector.load %arg9[%c0_27, %c0_28] : memref<1x1xf32, #tpu.memory_space<vmem>>, vector<1x1xf32>
    %49 = vector.broadcast %48 : vector<1x1xf32> to vector<8x1xf32>
    %50 = arith.addf %47, %49 : vector<8x1xf32>
    %cst_29 = arith.constant 0.000000e+00 : f32
    %51 = vector.broadcast %cst_29 : f32 to vector<8x1xf32>
    %52 = arith.subf %51, %50 : vector<8x1xf32>
    %53 = math.exp %52 : vector<8x1xf32>
    %cst_30 = arith.constant 1.000000e+00 : f32
    %54 = vector.broadcast %cst_30 : f32 to vector<8x1xf32>
    %55 = arith.addf %54, %53 : vector<8x1xf32>
    %56 = tpu.reciprocal %55 {approx = true} : vector<8x1xf32> -> vector<8x1xf32>
    %c0_31 = arith.constant 0 : index
    %c0_32 = arith.constant 0 : index
    %57 = vector.load %arg10[%c0_31, %c0_32] : memref<8x1xf32, #tpu.memory_space<vmem>>, vector<8x1xf32>
    tpu.vector_store %arg10[%c0_31, %c0_32], %56 {strides = array<i32>} : memref<8x1xf32, #tpu.memory_space<vmem>>, vector<8x1xf32>,
    return
  }
  func.func @transform_0(%arg0: i32) -> (i32, i32) {
    %c0_i32 = arith.constant 0 : i32
    %c0_i32_0 = arith.constant 0 : i32
    return %arg0, %c0_i32 : i32, i32
  }
  func.func @transform_1(%arg0: i32) -> (i32, i32) {
    %c0_i32 = arith.constant 0 : i32
    %c0_i32_0 = arith.constant 0 : i32
    %c0_i32_1 = arith.constant 0 : i32
    return %c0_i32, %c0_i32_0 : i32, i32
  }
  func.func @transform_2(%arg0: i32) -> (i32, i32) {
    %c0_i32 = arith.constant 0 : i32
    %c0_i32_0 = arith.constant 0 : i32
    %c0_i32_1 = arith.constant 0 : i32
    return %c0_i32, %c0_i32_0 : i32, i32
  }
  func.func @transform_3(%arg0: i32) -> (i32, i32) {
    %c0_i32 = arith.constant 0 : i32
    %c0_i32_0 = arith.constant 0 : i32
    %c0_i32_1 = arith.constant 0 : i32
    return %c0_i32, %c0_i32_0 : i32, i32
  }
  func.func @transform_4(%arg0: i32) -> (i32, i32) {
    %c0_i32 = arith.constant 0 : i32
    %c0_i32_0 = arith.constant 0 : i32
    %c0_i32_1 = arith.constant 0 : i32
    return %c0_i32, %c0_i32_0 : i32, i32
  }
  func.func @transform_5(%arg0: i32) -> (i32, i32) {
    %c0_i32 = arith.constant 0 : i32
    %c0_i32_0 = arith.constant 0 : i32
    %c0_i32_1 = arith.constant 0 : i32
    return %c0_i32, %c0_i32_0 : i32, i32
  }
  func.func @transform_6(%arg0: i32) -> (i32, i32) {
    %c0_i32 = arith.constant 0 : i32
    %c0_i32_0 = arith.constant 0 : i32
    %c0_i32_1 = arith.constant 0 : i32
    return %c0_i32, %c0_i32_0 : i32, i32
  }
  func.func @transform_7(%arg0: i32) -> (i32, i32) {
    %c0_i32 = arith.constant 0 : i32
    %c0_i32_0 = arith.constant 0 : i32
    %c0_i32_1 = arith.constant 0 : i32
    return %c0_i32, %c0_i32_0 : i32, i32
  }
  func.func @transform_8(%arg0: i32) -> (i32, i32) {
    %c0_i32 = arith.constant 0 : i32
    %c0_i32_0 = arith.constant 0 : i32
    %c0_i32_1 = arith.constant 0 : i32
    return %c0_i32, %c0_i32_0 : i32, i32
  }
  func.func @transform_9(%arg0: i32) -> (i32, i32) {
    %c0_i32 = arith.constant 0 : i32
    %c0_i32_0 = arith.constant 0 : i32
    return %arg0, %c0_i32 : i32, i32
  }
}

</mosaic_0001>

<llo_original>
// kernel: tpu_custom_call.1
$region0: #{tpu_custom_call.1}
  #allocation0 [shape = 'u32[]', space=smem, size = 0x4, offset = 0x4, fixed_abs, tag = 'smem constant byte address 0x4 - core index']
  #allocation1 [shape = 'u32[144,128]{1,0:T(1,128)}', space=vmem, size = 0x12000, scoped, tag = 'internal scratch']
  #allocation2 [shape = 'f32[1,1]{1,0:T(1,128)S(1)}', space=vmem, size = 0x200, scoped, tag = 'scoped memory for tpu_custom_call.1']
  %s0 = inlined_call_operand.hbm [shape: f32[8,32], index: 0, kind: input, shape index: {}]
  %s1 = inlined_call_operand.hbm [shape: bf16[32,128], index: 1, kind: input, shape index: {}]
  %s2 = inlined_call_operand.vmem [shape: f32[1,128], index: 2, kind: input, shape index: {}]
  %s3 = inlined_call_operand.hbm [shape: bf16[128,128], index: 3, kind: input, shape index: {}]
  %s4 = inlined_call_operand.vmem [shape: f32[1,128], index: 4, kind: input, shape index: {}]
  %s5 = inlined_call_operand.hbm [shape: bf16[128,128], index: 5, kind: input, shape index: {}]
  %s6 = inlined_call_operand.vmem [shape: f32[1,128], index: 6, kind: input, shape index: {}]
  %s7 = inlined_call_operand.vmem [shape: f32[1,128], index: 7, kind: input, shape index: {}]
  %s8 = inlined_call_operand.<no memory space> [shape: f32[1,1], index: 8, kind: input, shape index: {}]
  %s9 = inlined_call_operand.vmem [shape: f32[8,1], index: 9, kind: output, shape index: {}]
  %s10 = sld [smem:[#allocation0]]
  $region62: #{tpu_custom_call.1} parent=0
    _
  %s12 = ssub.s32 1, %s10
  %s13 = scalar_select 0, %s12, %s10
  %v14 = vstv %s8
  %15 = vst [vmem:[#allocation2] sm:$0x1] %v14
  $region1: #{tpu_custom_call.1} parent=0
    #allocation3 [shape = 'u8[4096]{0}', space=vmem, size = 0x1000, scoped, tag = 'input window, operand 0, single buffered']
    #allocation4 [shape = 's32[1]{0}', space=sflag, size = 0x4, scoped, tag = 'scoped memory for tpu_custom_call.1']
    #allocation5 [shape = 'u8[8192]{0}', space=vmem, size = 0x2000, scoped, tag = 'input window, operand 1, single buffered']
    #allocation6 [shape = 's32[1]{0}', space=sflag, size = 0x4, scoped, tag = 'scoped memory for tpu_custom_call.1']
    #allocation7 [shape = 'u8[32768]{0}', space=vmem, size = 0x8000, scoped, tag = 'input window, operand 3, single buffered']
    #allocation8 [shape = 'u8[32768]{0}', space=vmem, size = 0x8000, scoped, tag = 'input window, operand 5, single buffered']
    #allocation9 [shape = 's32[1]{0}', space=sflag, size = 0x4, scoped, tag = 'scoped memory for tpu_custom_call.1']
    %16 = vsyncpa [#allocation4], 0
    %17 = vsyncpa [#allocation6], 0
    %18 = vsyncpa [#allocation9], 0
    // Predicated region
    $region2: #{tpu_custom_call.1} parent=1 // pred_check
      _
    $region3: #{tpu_custom_call.1} parent=1 // pred_check_branch
      %20 = sbr.rel (0) target = $region5
    $region4: #{tpu_custom_call.1} parent=1 // pred_region
      %s22 = ssub.s32 128, 128
      %23 = vsyncadd [#allocation4], %s22
      %s25 = sshll.u32 [#allocation3], 4
      %s26 = int_to_ptr.vmem [resolvable:$true] %s25
      %28 = dma.hbm_to_vmem [thread:$0]  %s0, 128, %s26, [#allocation4]
    $region5: #{tpu_custom_call.1} parent=1 // pred_fallthru
      _
    // Predicated region
    $region6: #{tpu_custom_call.1} parent=1 // pred_check
      _
    $region7: #{tpu_custom_call.1} parent=1 // pred_check_branch
      %30 = sbr.rel (0) target = $region9
    $region8: #{tpu_custom_call.1} parent=1 // pred_region
      %s32 = ssub.s32 256, 256
      %33 = vsyncadd [#allocation6], %s32
      %s34 = sshll.u32 [#allocation5], 4
      %s35 = int_to_ptr.vmem [resolvable:$true] %s34
      %40 = dma.hbm_to_vmem [thread:$0]  %s1, 256, %s35, [#allocation6], 64, 64, 4
    $region9: #{tpu_custom_call.1} parent=1 // pred_fallthru
      _
    // Predicated region
    $region10: #{tpu_custom_call.1} parent=1 // pred_check
      _
    $region11: #{tpu_custom_call.1} parent=1 // pred_check_branch
      %42 = sbr.rel (0) target = $region13
    $region12: #{tpu_custom_call.1} parent=1 // pred_region
      _
    $region13: #{tpu_custom_call.1} parent=1 // pred_fallthru
      _
    // Predicated region
    $region14: #{tpu_custom_call.1} parent=1 // pred_check
      _
    $region15: #{tpu_custom_call.1} parent=1 // pred_check_branch
      %44 = sbr.rel (0) target = $region17
    $region16: #{tpu_custom_call.1} parent=1 // pred_region
      %s46 = ssub.s32 1024, 1024
      %47 = vsyncadd [#allocation6], %s46
      %s48 = sshll.u32 [#allocation7], 4
      %s49 = int_to_ptr.vmem [resolvable:$true] %s48
      %54 = dma.hbm_to_vmem [thread:$0]  %s3, 1024, %s49, [#allocation6], 64, 64, 4
    $region17: #{tpu_custom_call.1} parent=1 // pred_fallthru
      _
    // Predicated region
    $region18: #{tpu_custom_call.1} parent=1 // pred_check
      _
    $region19: #{tpu_custom_call.1} parent=1 // pred_check_branch
      %56 = sbr.rel (0) target = $region21
    $region20: #{tpu_custom_call.1} parent=1 // pred_region
      _
    $region21: #{tpu_custom_call.1} parent=1 // pred_fallthru
      _
    // Predicated region
    $region22: #{tpu_custom_call.1} parent=1 // pred_check
      _
    $region23: #{tpu_custom_call.1} parent=1 // pred_check_branch
      %58 = sbr.rel (0) target = $region25
    $region24: #{tpu_custom_call.1} parent=1 // pred_region
      %s60 = ssub.s32 1024, 1024
      %61 = vsyncadd [#allocation9], %s60
      %s62 = sshll.u32 [#allocation8], 4
      %s63 = int_to_ptr.vmem [resolvable:$true] %s62
      %68 = dma.hbm_to_vmem [thread:$0]  %s5, 1024, %s63, [#allocation9], 64, 64, 4
    $region25: #{tpu_custom_call.1} parent=1 // pred_fallthru
      _
    // Predicated region
    $region26: #{tpu_custom_call.1} parent=1 // pred_check
      _
    $region27: #{tpu_custom_call.1} parent=1 // pred_check_branch
      %70 = sbr.rel (0) target = $region29
    $region28: #{tpu_custom_call.1} parent=1 // pred_region
      _
    $region29: #{tpu_custom_call.1} parent=1 // pred_fallthru
      _
    // Predicated region
    $region30: #{tpu_custom_call.1} parent=1 // pred_check
      _
    $region31: #{tpu_custom_call.1} parent=1 // pred_check_branch
      %72 = sbr.rel (0) target = $region33
    $region32: #{tpu_custom_call.1} parent=1 // pred_region
      _
    $region33: #{tpu_custom_call.1} parent=1 // pred_fallthru
      _
    // Predicated region
    $region34: #{tpu_custom_call.1} parent=1 // pred_check
      _
    $region35: #{tpu_custom_call.1} parent=1 // pred_check_branch
      %74 = sbr.rel (0) target = $region37
    $region36: #{tpu_custom_call.1} parent=1 // pred_region
      _
    $region37: #{tpu_custom_call.1} parent=1 // pred_fallthru
      _
    // Predicated region
    $region38: #{tpu_custom_call.1} parent=1 // pred_check
      _
    $region39: #{tpu_custom_call.1} parent=1 // pred_check_branch
      %76 = sbr.rel (0) target = $region41
    $region40: #{tpu_custom_call.1} parent=1 // pred_region
      %77 = dma.done [#allocation4], 128
    $region41: #{tpu_custom_call.1} parent=1 // pred_fallthru
      _
    // Predicated region
    $region42: #{tpu_custom_call.1} parent=1 // pred_check
      _
    $region43: #{tpu_custom_call.1} parent=1 // pred_check_branch
      %79 = sbr.rel (0) target = $region45
    $region44: #{tpu_custom_call.1} parent=1 // pred_region
      %80 = dma.done [#allocation6], 256
    $region45: #{tpu_custom_call.1} parent=1 // pred_fallthru
      _
    // Predicated region
    $region46: #{tpu_custom_call.1} parent=1 // pred_check
      _
    $region47: #{tpu_custom_call.1} parent=1 // pred_check_branch
      %82 = sbr.rel (0) target = $region49
    $region48: #{tpu_custom_call.1} parent=1 // pred_region
      %83 = dma.done [#allocation6], 1024
    $region49: #{tpu_custom_call.1} parent=1 // pred_fallthru
      _
    // Predicated region
    $region50: #{tpu_custom_call.1} parent=1 // pred_check
      _
    $region51: #{tpu_custom_call.1} parent=1 // pred_check_branch
      %85 = sbr.rel (0) target = $region53
    $region52: #{tpu_custom_call.1} parent=1 // pred_region
      %86 = dma.done [#allocation9], 1024
    $region53: #{tpu_custom_call.1} parent=1 // pred_fallthru
      _
    %v88 = vld [vmem:[#allocation3] sm:$0xff]
    %v89 = vpack.c.bf16 %v88, %v88
    %v90 = vld [vmem:[#allocation5] sm:$0xf]
    %v91 = vld [vmem:[#allocation5 + $0x4] sm:$0xf]
    %v92 = vld [vmem:[#allocation5 + $0x8] sm:$0xf]
    %v93 = vld [vmem:[#allocation5 + $0xc] sm:$0xf]
    %v94 = vld [vmem:[%s2] sm:$0x1]
    %v96 = vlaneseq
    %v97 = vshrl.u32 %v96, 7
    %v98 = vsub.s32 0, %v97
    %v99 = vrot.slane %v94, %v98
    %v105 = vunpack.c.l.b16 %v90
    %v106 = vunpack.c.l.b16 %v91
    %v107 = vunpack.c.l.b16 %v92
    %v108 = vunpack.c.l.b16 %v93
    %v109 = vpack.c.b16 %v106, %v105
    %v110 = vpack.c.b16 %v108, %v107
    %vm113 = vcmask 261120
    %v115 = vsel %vm113, %v89, 0
    %117 = vmatprep.subr.bf16.mxu0 0
    %118 = vmatpush1.bf16.msra.mxu0 %v109
    %119 = vmatprep.subr.bf16.mxu0 0
    %120 = vmatpush1.bf16.msra.mxu0 %v110
    %121 = vmatprep.subr.bf16.mxu0 0
    %122 = vmatpush1.bf16.msra.mxu0 0
    %123 = vmatprep.subr.bf16.mxu0 0
    %124 = vmatpush1.bf16.msra.mxu0 0
    %125 = vmatprep.subr.bf16.mxu0 0
    %126 = vmatpush1.bf16.msra.mxu0 0
    %127 = vmatprep.subr.bf16.mxu0 0
    %128 = vmatpush1.bf16.msra.mxu0 0
    %129 = vmatprep.subr.bf16.mxu0 0
    %130 = vmatpush1.bf16.msra.mxu0 0
    %131 = vmatprep.subr.bf16.mxu0 0
    %132 = vmatpush1.bf16.msra.mxu0 0
    %133 = vmatprep.subr.bf16.mxu0 0
    %134 = vmatpush1.bf16.msra.mxu0 0
    %135 = vmatprep.subr.bf16.mxu0 0
    %136 = vmatpush1.bf16.msra.mxu0 0
    %137 = vmatprep.subr.bf16.mxu0 0
    %138 = vmatpush1.bf16.msra.mxu0 0
    %139 = vmatprep.subr.bf16.mxu0 0
    %140 = vmatpush1.bf16.msra.mxu0 0
    %141 = vmatprep.subr.bf16.mxu0 0
    %142 = vmatpush1.bf16.msra.mxu0 0
    %143 = vmatprep.subr.bf16.mxu0 0
    %144 = vmatpush1.bf16.msra.mxu0 0
    %145 = vmatprep.subr.bf16.mxu0 0
    %146 = vmatpush1.bf16.msra.mxu0 0
    %147 = vmatprep.subr.bf16.mxu0 0
    %148 = vmatpush1.bf16.msra.mxu0 0
    %149 = vmatprep.mubr.bf16.mxu0 0
    %150 = vmatmul.mubr.bf16.gmra.mrb[0].mxu0 %v115
    %v151 = vpop.f32.mrb[0].mxu0
    %v152 = vadd.f32 %v99, %v151
    %v153 = vpop.f32.mrb[0].mxu0
    %v154 = vpop.f32.mrb[0].mxu0
    %v155 = vpop.f32.mrb[0].mxu0
    %156 = vdwg.mxu0
    %vm157 = vcmp.gt.f32.partialorder %v152, 0.0
    %v158 = vmin.f32 %v152, 0.0
    %v159 = vmul.f32 %v158, 1.442695
    %v160 = vpow.pop %v159
    %v161 = vsub.f32 %v160, 1.0
    %v162 = vsel %vm157, %v152, %v161
    %v163 = vpack.c.bf16 %v162, %v162
    %v164 = vld [vmem:[#allocation7] sm:$0xf]
    %v165 = vld [vmem:[#allocation7 + $0x4] sm:$0xf]
    %v166 = vld [vmem:[#allocation7 + $0x8] sm:$0xf]
    %v167 = vld [vmem:[#allocation7 + $0xc] sm:$0xf]
    %v168 = vld [vmem:[#allocation7 + $0x10] sm:$0xf]
    %v169 = vld [vmem:[#allocation7 + $0x14] sm:$0xf]
    %v170 = vld [vmem:[#allocation7 + $0x18] sm:$0xf]
    %v171 = vld [vmem:[#allocation7 + $0x1c] sm:$0xf]
    %v172 = vld [vmem:[#allocation7 + $0x20] sm:$0xf]
    %v173 = vld [vmem:[#allocation7 + $0x24] sm:$0xf]
    %v174 = vld [vmem:[#allocation7 + $0x28] sm:$0xf]
    %v175 = vld [vmem:[#allocation7 + $0x2c] sm:$0xf]
    %v176 = vld [vmem:[#allocation7 + $0x30] sm:$0xf]
    %v177 = vld [vmem:[#allocation7 + $0x34] sm:$0xf]
    %v178 = vld [vmem:[#allocation7 + $0x38] sm:$0xf]
    %v179 = vld [vmem:[#allocation7 + $0x3c] sm:$0xf]
    %v180 = vld [vmem:[%s4] sm:$0x1]
    %v182 = vlaneseq
    %v183 = vshrl.u32 %v182, 7
    %v184 = vsub.s32 0, %v183
    %v185 = vrot.slane %v180, %v184
    %v203 = vunpack.c.l.b16 %v164
    %v204 = vunpack.c.l.b16 %v165
    %v205 = vunpack.c.l.b16 %v166
    %v206 = vunpack.c.l.b16 %v167
    %v207 = vunpack.c.l.b16 %v168
    %v208 = vunpack.c.l.b16 %v169
    %v209 = vunpack.c.l.b16 %v170
    %v210 = vunpack.c.l.b16 %v171
    %v211 = vunpack.c.l.b16 %v172
    %v212 = vunpack.c.l.b16 %v173
    %v213 = vunpack.c.l.b16 %v174
    %v214 = vunpack.c.l.b16 %v175
    %v215 = vunpack.c.l.b16 %v176
    %v216 = vunpack.c.l.b16 %v177
    %v217 = vunpack.c.l.b16 %v178
    %v218 = vunpack.c.l.b16 %v179
    %v219 = vpack.c.b16 %v204, %v203
    %v220 = vpack.c.b16 %v206, %v205
    %v221 = vpack.c.b16 %v208, %v207
    %v222 = vpack.c.b16 %v210, %v209
    %v223 = vpack.c.b16 %v212, %v211
    %v224 = vpack.c.b16 %v214, %v213
    %v225 = vpack.c.b16 %v216, %v215
    %v226 = vpack.c.b16 %v218, %v217
    %235 = vmatprep.subr.bf16.mxu0 0
    %236 = vmatpush1.bf16.msra.mxu0 %v219
    %237 = vmatprep.subr.bf16.mxu0 0
    %238 = vmatpush1.bf16.msra.mxu0 %v220
    %239 = vmatprep.subr.bf16.mxu0 0
    %240 = vmatpush1.bf16.msra.mxu0 %v221
    %241 = vmatprep.subr.bf16.mxu0 0
    %242 = vmatpush1.bf16.msra.mxu0 %v222
    %243 = vmatprep.subr.bf16.mxu0 0
    %244 = vmatpush1.bf16.msra.mxu0 %v223
    %245 = vmatprep.subr.bf16.mxu0 0
    %246 = vmatpush1.bf16.msra.mxu0 %v224
    %247 = vmatprep.subr.bf16.mxu0 0
    %248 = vmatpush1.bf16.msra.mxu0 %v225
    %249 = vmatprep.subr.bf16.mxu0 0
    %250 = vmatpush1.bf16.msra.mxu0 %v226
    %251 = vmatprep.subr.bf16.mxu0 0
    %252 = vmatpush1.bf16.msra.mxu0 0
    %253 = vmatprep.subr.bf16.mxu0 0
    %254 = vmatpush1.bf16.msra.mxu0 0
    %255 = vmatprep.subr.bf16.mxu0 0
    %256 = vmatpush1.bf16.msra.mxu0 0
    %257 = vmatprep.subr.bf16.mxu0 0
    %258 = vmatpush1.bf16.msra.mxu0 0
    %259 = vmatprep.subr.bf16.mxu0 0
    %260 = vmatpush1.bf16.msra.mxu0 0
    %261 = vmatprep.subr.bf16.mxu0 0
    %262 = vmatpush1.bf16.msra.mxu0 0
    %263 = vmatprep.subr.bf16.mxu0 0
    %264 = vmatpush1.bf16.msra.mxu0 0
    %265 = vmatprep.subr.bf16.mxu0 0
    %266 = vmatpush1.bf16.msra.mxu0 0
    %267 = vmatprep.mubr.bf16.mxu0 0
    %268 = vmatmul.mubr.bf16.gmra.mrb[0].mxu0 %v163
    %v269 = vpop.f32.mrb[0].mxu0
    %v270 = vadd.f32 %v185, %v269
    %v271 = vpop.f32.mrb[0].mxu0
    %v272 = vpop.f32.mrb[0].mxu0
    %v273 = vpop.f32.mrb[0].mxu0
    %274 = vdwg.mxu0
    %vm275 = vcmp.gt.f32.partialorder %v270, 0.0
    %v276 = vmin.f32 %v270, 0.0
    %v277 = vmul.f32 %v276, 1.442695
    %v278 = vpow.pop %v277
    %v279 = vsub.f32 %v278, 1.0
    %v280 = vsel %vm275, %v270, %v279
    %v281 = vpack.c.bf16 %v280, %v280
    %v282 = vld [vmem:[#allocation8] sm:$0xf]
    %v283 = vld [vmem:[#allocation8 + $0x4] sm:$0xf]
    %v284 = vld [vmem:[#allocation8 + $0x8] sm:$0xf]
    %v285 = vld [vmem:[#allocation8 + $0xc] sm:$0xf]
    %v286 = vld [vmem:[#allocation8 + $0x10] sm:$0xf]
    %v287 = vld [vmem:[#allocation8 + $0x14] sm:$0xf]
    %v288 = vld [vmem:[#allocation8 + $0x18] sm:$0xf]
    %v289 = vld [vmem:[#allocation8 + $0x1c] sm:$0xf]
    %v290 = vld [vmem:[#allocation8 + $0x20] sm:$0xf]
    %v291 = vld [vmem:[#allocation8 + $0x24] sm:$0xf]
    %v292 = vld [vmem:[#allocation8 + $0x28] sm:$0xf]
    %v293 = vld [vmem:[#allocation8 + $0x2c] sm:$0xf]
    %v294 = vld [vmem:[#allocation8 + $0x30] sm:$0xf]
    %v295 = vld [vmem:[#allocation8 + $0x34] sm:$0xf]
    %v296 = vld [vmem:[#allocation8 + $0x38] sm:$0xf]
    %v297 = vld [vmem:[#allocation8 + $0x3c] sm:$0xf]
    %v298 = vld [vmem:[%s6] sm:$0x1]
    %v300 = vlaneseq
    %v301 = vshrl.u32 %v300, 7
    %v302 = vsub.s32 0, %v301
    %v303 = vrot.slane %v298, %v302
    %v321 = vunpack.c.l.b16 %v282
    %v322 = vunpack.c.l.b16 %v283
    %v323 = vunpack.c.l.b16 %v284
    %v324 = vunpack.c.l.b16 %v285
    %v325 = vunpack.c.l.b16 %v286
    %v326 = vunpack.c.l.b16 %v287
    %v327 = vunpack.c.l.b16 %v288
    %v328 = vunpack.c.l.b16 %v289
    %v329 = vunpack.c.l.b16 %v290
    %v330 = vunpack.c.l.b16 %v291
    %v331 = vunpack.c.l.b16 %v292
    %v332 = vunpack.c.l.b16 %v293
    %v333 = vunpack.c.l.b16 %v294
    %v334 = vunpack.c.l.b16 %v295
    %v335 = vunpack.c.l.b16 %v296
    %v336 = vunpack.c.l.b16 %v297
    %v337 = vpack.c.b16 %v322, %v321
    %v338 = vpack.c.b16 %v324, %v323
    %v339 = vpack.c.b16 %v326, %v325
    %v340 = vpack.c.b16 %v328, %v327
    %v341 = vpack.c.b16 %v330, %v329
    %v342 = vpack.c.b16 %v332, %v331
    %v343 = vpack.c.b16 %v334, %v333
    %v344 = vpack.c.b16 %v336, %v335
    %353 = vmatprep.subr.bf16.mxu0 0
    %354 = vmatpush1.bf16.msra.mxu0 %v337
    %355 = vmatprep.subr.bf16.mxu0 0
    %356 = vmatpush1.bf16.msra.mxu0 %v338
    %357 = vmatprep.subr.bf16.mxu0 0
    %358 = vmatpush1.bf16.msra.mxu0 %v339
    %359 = vmatprep.subr.bf16.mxu0 0
    %360 = vmatpush1.bf16.msra.mxu0 %v340
    %361 = vmatprep.subr.bf16.mxu0 0
    %362 = vmatpush1.bf16.msra.mxu0 %v341
    %363 = vmatprep.subr.bf16.mxu0 0
    %364 = vmatpush1.bf16.msra.mxu0 %v342
    %365 = vmatprep.subr.bf16.mxu0 0
    %366 = vmatpush1.bf16.msra.mxu0 %v343
    %367 = vmatprep.subr.bf16.mxu0 0
    %368 = vmatpush1.bf16.msra.mxu0 %v344
    %369 = vmatprep.subr.bf16.mxu0 0
    %370 = vmatpush1.bf16.msra.mxu0 0
    %371 = vmatprep.subr.bf16.mxu0 0
    %372 = vmatpush1.bf16.msra.mxu0 0
    %373 = vmatprep.subr.bf16.mxu0 0
    %374 = vmatpush1.bf16.msra.mxu0 0
    %375 = vmatprep.subr.bf16.mxu0 0
    %376 = vmatpush1.bf16.msra.mxu0 0
    %377 = vmatprep.subr.bf16.mxu0 0
    %378 = vmatpush1.bf16.msra.mxu0 0
    %379 = vmatprep.subr.bf16.mxu0 0
    %380 = vmatpush1.bf16.msra.mxu0 0
    %381 = vmatprep.subr.bf16.mxu0 0
    %382 = vmatpush1.bf16.msra.mxu0 0
    %383 = vmatprep.subr.bf16.mxu0 0
    %384 = vmatpush1.bf16.msra.mxu0 0
    %385 = vmatprep.mubr.bf16.mxu0 0
    %386 = vmatmul.mubr.bf16.gmra.mrb[0].mxu0 %v281
    %v387 = vpop.f32.mrb[0].mxu0
    %v388 = vadd.f32 %v303, %v387
    %v389 = vpop.f32.mrb[0].mxu0
    %v390 = vpop.f32.mrb[0].mxu0
    %v391 = vpop.f32.mrb[0].mxu0
    %392 = vdwg.mxu0
    %vm393 = vcmp.gt.f32.partialorder %v388, 0.0
    %v394 = vmin.f32 %v388, 0.0
    %v395 = vmul.f32 %v394, 1.442695
    %v396 = vpow.pop %v395
    %v397 = vsub.f32 %v396, 1.0
    %v398 = vsel %vm393, %v388, %v397
    %v399 = vld [vmem:[%s7] sm:$0x1]
    %v401 = vlaneseq
    %v402 = vshrl.u32 %v401, 7
    %v403 = vsub.s32 0, %v402
    %v404 = vrot.slane %v399, %v403
    %v406 = vmul.f32 %v398, %v404
    %407 = vadd.xlane.f32.xlu0 %v406
    %v408 = vpop.xlane.xlu0 %407
    %v409 = vld [vmem:[#allocation2] sm:$0x1]
    %v411 = vlaneseq
    %v412 = vshrl.u32 %v411, 7
    %v413 = vsub.s32 0, %v412
    %v414 = vrot.slane %v409, %v413
    %v416 = vadd.f32 %v408, %v414
    %v417 = vsub.f32 0.0, %v416
    %v418 = vmul.f32 %v417, 1.442695
    %v419 = vpow.pop %v418
    %v420 = vadd.f32 %v419, 1.0
    %v421 = vrcp.pop %v420
    %vm422 = vcmask 7168
    %423 = vst.msk [vmem:[%s9] sm:$0xff] %vm422, %v421
    // Predicated region
    $region54: #{tpu_custom_call.1} parent=1 // pred_check
      _
    $region55: #{tpu_custom_call.1} parent=1 // pred_check_branch
      %425 = sbr.rel (0) target = $region57
    $region56: #{tpu_custom_call.1} parent=1 // pred_region
      _
    $region57: #{tpu_custom_call.1} parent=1 // pred_fallthru
      _
    // Predicated region
    $region58: #{tpu_custom_call.1} parent=1 // pred_check
      _
    $region59: #{tpu_custom_call.1} parent=1 // pred_check_branch
      %427 = sbr.rel (0) target = $region61
    $region60: #{tpu_custom_call.1} parent=1 // pred_region
      _
    $region61: #{tpu_custom_call.1} parent=1 // pred_fallthru
      _
    %428 = vsyncpa [#allocation4], 1
    %429 = vsyncpa [#allocation6], 1
    %430 = vsyncpa [#allocation9], 1

</llo_original>
